<compile_context>
chip_gen: v7x
topology: tpu7x:2x2x1
jax: 0.10.0
libtpu: 0.0.40
codegen_flags: <defaults>
</compile_context>

<pallas_src>
import jax
import jax.numpy as jnp
from jax.experimental import pallas as pl
from jax.experimental.pallas import tpu as pltpu


_LANE = 128
_PARAMS_RESIDENT_MAX_ROWS = 4096   # lane-padded table stays <= ~2 MiB per buffer


def _round_up(a, b):
    return ((a + b - 1) // b) * b


def _sublane_multiple(itemsize):
    # Native sublane packing: f32 -> 8, bf16/f16 -> 16, int8/fp8 -> 32.
    return 8 * max(1, 4 // max(int(itemsize), 1))


def _largest_divisor_multiple(total, unit, limit):
    """Largest t with t % unit == 0, total % t == 0 and t <= max(limit, unit).
    Assumes total % unit == 0."""
    limit = max(unit, (limit // unit) * unit)
    if total <= limit:
        return total
    t = limit
    while t > unit and total % t != 0:
        t -= unit
    return t


def _block_cap_bytes():
    """Per-block byte cap.  ~4 MiB already streams at >=85% of HBM roofline on
    every generation; bump a little on v7x where the 3.2 TB/s HBM makes the
    fixed per-step cost a larger fraction, while staying far under its
    64 MiB-per-TC VMEM."""
    cap = 4 << 20
    try:
        if pltpu.get_tpu_info().vmem_capacity_bytes <= (64 << 20):   # v7x
            cap = 6 << 20
    except Exception:
        pass
    return cap


def _pick_tiles(rows, cols, itemsize, mult, cap):
    """Pick (tm, tc).  Caller guarantees rows % mult == 0 and cols % 128 == 0,
    so blocks are always (sublane, lane)-aligned and bounded by `cap`."""
    tc = cols
    row_budget = cap // max(tc * itemsize, 1)
    if row_budget < mult:
        # Even `mult` full-width rows exceed the cap -> shrink the lane axis.
        tm = mult
        lane_budget = cap // max(mult * itemsize, 1)
        tc = _largest_divisor_multiple(cols, _LANE, lane_budget)
    else:
        tm = _largest_divisor_multiple(rows, mult, row_budget)

    # Guarantee >= 2 grid steps so the 'parallel' axes can shard across both
    # v7x TensorCores (costs one extra ~0.35us step on single-TC chips).
    if (rows // tm) * (cols // tc) < 2:
        if rows % (2 * mult) == 0:
            tm = rows // 2
        elif cols % (2 * _LANE) == 0:
            tc = cols // 2
    return tm, tc


# ----------------------------- Pallas kernel ------------------------------

def _make_kernel(tm, params_resident):
    def normalize_kernel(x_ref, p_ref, o_ref):
        """o = (x - mean_row) * inv_std_row.

        x_ref : (tm, tc)        activation tile (rows = (n, c), lanes = h*w)
        p_ref : (rows, 2) fp32  grid-resident packed params (mean, 1/std), or
                (tm, 2)   fp32  per-tile block when not resident.
        """
        if params_resident:
            r0 = pl.multiple_of(pl.program_id(0) * tm, tm)
            p = p_ref[pl.ds(r0, tm), :]
        else:
            p = p_ref[...]
        mean = p[:, 0:1]       # (tm, 1) -> broadcast along lanes
        inv_std = p[:, 1:2]    # (tm, 1)
        o_ref[...] = ((x_ref[...] - mean) * inv_std).astype(o_ref.dtype)

    return normalize_kernel


# ----------------------------- wrapper -------------------------------------

def normalize_nchw(x, mean, std):
    """Pallas implementation of Normalize_layer.forward for NCHW input."""
    N, C, H, W = x.shape
    rows, cols = N * C, H * W
    itemsize = jnp.dtype(x.dtype).itemsize
    mult = _sublane_multiple(itemsize)

    rows_p = _round_up(rows, mult)
    cols_p = _round_up(cols, _LANE)

    # Contiguous reshape (no data movement); pad only when the shape is not
    # natively aligned, so blocks stay bounded and output stores lane-dense.
    x2 = x.reshape(rows, cols)
    if (rows_p, cols_p) != (rows, cols):
        x2 = jnp.pad(x2, ((0, rows_p - rows), (0, cols_p - cols)))

    # Per-row packed params in fp32: col 0 = mean(channel), col 1 = 1/std(channel).
    mean_r = jnp.tile(mean.reshape(-1).astype(jnp.float32), N)
    inv_r = jnp.tile((1.0 / std.reshape(-1)).astype(jnp.float32), N)
    if rows_p != rows:
        mean_r = jnp.pad(mean_r, (0, rows_p - rows))
        inv_r = jnp.pad(inv_r, (0, rows_p - rows), constant_values=1.0)
    params = jnp.stack([mean_r, inv_r], axis=-1)            # (rows_p, 2) fp32

    cap = _block_cap_bytes()
    tm, tc = _pick_tiles(rows_p, cols_p, itemsize, mult, cap)
    grid = (rows_p // tm, cols_p // tc)

    params_resident = rows_p <= _PARAMS_RESIDENT_MAX_ROWS
    if params_resident:
        p_spec = pl.BlockSpec((rows_p, 2), lambda i, j: (0, 0))
        p_rows_blk = rows_p
    else:
        p_spec = pl.BlockSpec((tm, 2), lambda i, j: (i, 0))
        p_rows_blk = tm

    # VMEM budget: 2 buffers x (x block + out block) + params block, which
    # pads from (*, 2) to (*, 128) lanes in VMEM, plus slack.
    xo_blk = tm * tc * itemsize
    p_blk = _round_up(p_rows_blk, 8) * _LANE * 4
    vmem_limit = min(4 * xo_blk + 2 * p_blk + (2 << 20), 48 << 20)

    out = pl.pallas_call(
        _make_kernel(tm, params_resident),
        out_shape=jax.ShapeDtypeStruct((rows_p, cols_p), x.dtype),
        grid_spec=pltpu.PrefetchScalarGridSpec(
            num_scalar_prefetch=0,
            grid=grid,
            in_specs=[pl.BlockSpec((tm, tc), lambda i, j: (i, j)),
                      p_spec],
            out_specs=pl.BlockSpec((tm, tc), lambda i, j: (i, j))),
        compiler_params=pltpu.CompilerParams(
            dimension_semantics=("parallel", "parallel"),
            vmem_limit_bytes=vmem_limit),
        cost_estimate=pl.CostEstimate(
            flops=2 * rows_p * cols_p,
            transcendentals=0,
            bytes_accessed=2 * rows_p * cols_p * itemsize + rows_p * 2 * 4),
    )(x2, params)

    if (rows_p, cols_p) != (rows, cols):
        out = out[:rows, :cols]
    return out.reshape(N, C, H, W)


# ----------------------------- demo / check --------------------------------

if __name__ == "__main__":
    key = jax.random.PRNGKey(0)
    kx, km, ks = jax.random.split(key, 3)

    # Small NCHW image batch consistent with the module.
    N, C, H, W = 2, 4, 16, 16
    x = jax.random.normal(kx, (N, C, H, W), jnp.float32)
    mean = 0.5 * jax.random.normal(km, (C,), jnp.float32)
    std = 0.5 + jnp.abs(jax.random.normal(ks, (C,), jnp.float32))   # > 0

    fwd = jax.jit(normalize_nchw)
    y = jax.block_until_ready(fwd(x, mean, std))

    # Reference: input.sub(mean[:,None,None]).div(std[:,None,None])
    ref = (x - mean[None, :, None, None]) / std[None, :, None, None]

    assert y.shape == x.shape, y.shape
    assert bool(jnp.all(jnp.isfinite(y)))
    assert bool(jnp.allclose(y, ref, rtol=1e-5, atol=1e-5))
    print("KERNEL_OK")
</pallas_src>

<mosaic_0001>
module attributes {stable_mosaic.version = 11 : i64} {
  func.func @normalize_kernel(%arg0: i32, %arg1: i32, %arg2: memref<8x128xf32, #tpu.memory_space<vmem>>, %arg3: memref<8x2xf32, #tpu.memory_space<vmem>>, %arg4: memref<8x128xf32, #tpu.memory_space<vmem>>) attributes {dimension_semantics = [#tpu.dimension_semantics<parallel>, #tpu.dimension_semantics<parallel>], iteration_bounds = array<i64: 1, 2>, scalar_prefetch = 0 : i64, scratch_operands = 0 : i64, tpu.core_type = #tpu.core_type<tc>, window_params = [{transform_indices = @transform_0, window_bounds = array<i64: 8, 128>}, {pipeline_mode = #tpu.pipeline_mode<synchronous>, transform_indices = @transform_1, window_bounds = array<i64: 8, 2>}, {transform_indices = @transform_2, window_bounds = array<i64: 8, 128>}]} {
    %c8_i32 = arith.constant 8 : i32
    %0 = arith.muli %arg0, %c8_i32 : i32
    %1 = tpu.assume_multiple %0, 8 : i32
    %2 = arith.index_cast %1 : i32 to index
    %c0 = arith.constant 0 : index
    %3 = vector.load %arg3[%2, %c0] : memref<8x2xf32, #tpu.memory_space<vmem>>, vector<8x2xf32>
    %4 = vector.extract_strided_slice %3 {offsets = [0, 0], sizes = [8, 1], strides = [1, 1]} : vector<8x2xf32> to vector<8x1xf32>
    %5 = vector.extract_strided_slice %3 {offsets = [0, 1], sizes = [8, 1], strides = [1, 1]} : vector<8x2xf32> to vector<8x1xf32>
    %c0_0 = arith.constant 0 : index
    %c0_1 = arith.constant 0 : index
    %6 = vector.load %arg2[%c0_0, %c0_1] : memref<8x128xf32, #tpu.memory_space<vmem>>, vector<8x128xf32>
    %7 = vector.broadcast %4 : vector<8x1xf32> to vector<8x128xf32>
    %8 = arith.subf %6, %7 : vector<8x128xf32>
    %9 = vector.broadcast %5 : vector<8x1xf32> to vector<8x128xf32>
    %10 = arith.mulf %8, %9 : vector<8x128xf32>
    %c0_2 = arith.constant 0 : index
    %c0_3 = arith.constant 0 : index
    %11 = vector.load %arg4[%c0_2, %c0_3] : memref<8x128xf32, #tpu.memory_space<vmem>>, vector<8x128xf32>
    tpu.vector_store %arg4[%c0_2, %c0_3], %10 {strides = array<i32>} : memref<8x128xf32, #tpu.memory_space<vmem>>, vector<8x128xf32>,
    return
  }
  func.func @transform_0(%arg0: i32, %arg1: i32) -> (i32, i32) {
    %c0_i32 = arith.constant 0 : i32
    return %arg0, %arg1 : i32, i32
  }
  func.func @transform_1(%arg0: i32, %arg1: i32) -> (i32, i32) {
    %c0_i32 = arith.constant 0 : i32
    %c0_i32_0 = arith.constant 0 : i32
    %c0_i32_1 = arith.constant 0 : i32
    return %c0_i32, %c0_i32_0 : i32, i32
  }
  func.func @transform_2(%arg0: i32, %arg1: i32) -> (i32, i32) {
    %c0_i32 = arith.constant 0 : i32
    return %arg0, %arg1 : i32, i32
  }
}

</mosaic_0001>

<llo_original>
// kernel: tile.17
$region0: #{tile.17}
  #allocation0 [shape = 's32[1]{0}', space=sflag, size = 0x4, scoped, tag = 'scoped memory for tile.17']
  %s0 = inlined_call_operand.vmem [shape: f32[4], index: 0, kind: input, shape index: {}]
  %s1 = inlined_call_operand.vmem [shape: f32[2,4], index: 1, kind: output, shape index: {}]
  // Predicated region
  $region2: #{tile.17} parent=0 // pred_check
    _
  $region3: #{tile.17} parent=0 // pred_check_branch
    %3 = sbr.rel (0) target = $region5
  $region4: #{tile.17} parent=0 // pred_region
    _
  $region5: #{tile.17} parent=0 // pred_fallthru
    _
  %v4 = vld [vmem:[%s0] ss:$0 sm:$0xff]
  %5 = vst [vmem:[%s1] sm:$0x3] %v4

// kernel: tile.19
$region0: #{tile.19}
  %s0 = inlined_call_operand.vmem [shape: f32[2,4], index: 0, kind: input, shape index: {}]
  %s1 = inlined_call_operand.vmem [shape: f32[8,1], index: 1, kind: output, shape index: {}]
  $region1: #{tile.19} parent=0
    #allocation0 [shape = 'u8[4096]{0}', space=vmem, size = 0x1000, scoped, tag = 'scoped mem for output reshape']
    #allocation1 [shape = 'u8[4096]{0}', space=vmem, size = 0x1000, scoped, tag = 'scoped mem for input reshape']
    %s3 = sshllo.u32 0, 2
    %v4 = vld [vmem:[%s0] sm:%s3]
    %5 = vst [vmem:[#allocation1] sm:%s3] %v4
    %v6 = vld [vmem:[#allocation1] sm:$0x1]
    %vm7 = vcmask 31744
    %8 = vst.msk [vmem:[#allocation0] sm:$0x1] %vm7, %v6
    %s9 = scalar_lea.vmem [#allocation1], 1
    %v10 = vld [vmem:[%s9] sm:$0x1]
    %11 = vrot.lane.b32.xlu0 %v10, 4
    %v12 = vpop.permute.xlu0 %11
    %vm13 = vcmask 64544
    %14 = vst.msk [vmem:[#allocation0] sm:$0x1] %vm13, %v12
    %s16 = sshllo.u32 0, 1
    %v18 = vld [vmem:[#allocation0] sm:%s16]
    %s19 = sshllo.u32 0, 1
    %20 = vst [vmem:[%s1] sm:%s19] %v18

// kernel: normalize_nchw.1
$region0: #{normalize_nchw.1}
  #allocation0 [shape = 'u32[]', space=smem, size = 0x4, offset = 0x4, fixed_abs, tag = 'smem constant byte address 0x4 - core index']
  #allocation1 [shape = 'u32[144,128]{1,0:T(1,128)}', space=vmem, size = 0x12000, scoped, tag = 'internal scratch']
  %s0 = inlined_call_operand.vmem [shape: f32[8,256], index: 0, kind: input, shape index: {}]
  %s1 = inlined_call_operand.vmem [shape: f32[8,2], index: 1, kind: input, shape index: {}]
  %s2 = inlined_call_operand.vmem [shape: f32[8,256], index: 2, kind: output, shape index: {}]
  %s3 = sld [smem:[#allocation0]]
  $region41: #{normalize_nchw.1} parent=0
    _
  %s5 = ssub.s32 1, %s3
  %s6 = scalar_select 0, %s5, %s3
  loop: start=0, step=1, limit=4
  $region2: #{normalize_nchw.1} parent=0 // loop_pre_header
    _
  $region3: #{normalize_nchw.1} parent=0 // loop_header
    %s8 = sphi 0, %s12
    %p9 = scmp.ge.s32.totalorder %s8, 4
    %s15 = sphi 0, %s27
    %s16 = sphi 0, %s23
    %s17 = sphi 0, %s15
    %s18 = sphi 0, %s16
    %s19 = sphi 0, %s17
    %s20 = sphi 0, %s18
    %s32 = sphi 0, %s34
    %s35 = sphi 0, %s32
    %s36 = sphi 0, %s35
    %s52 = sphi 0, %s36
    %s56 = sphi 0, %s56
    %s58 = sphi 0, %s56
    %s59 = sphi 0, %s58
    %s73 = sphi 0, %s59
    %s81 = sphi 0, %s83
    %s84 = sphi 0, %s81
    %s85 = sphi 0, %s84
    %s101 = sphi 0, %s85
  $region4: #{normalize_nchw.1} parent=0 // loop_header_branch
    %11 = sbr.rel (%p9) target = $region8
  $region5: #{normalize_nchw.1} parent=0 // loop_body
    %s13 = ssub.s32 %s8, 1
    %s14 = ssub.s32 %s8, 2
    %s21 = sadd.s32 1, %s16
    %p22 = scmp.ge.s32.totalorder %s21, 2
    %s23 = scalar_select %p22, 0, %s21
    %s24 = sadd.s32 1, %s15
    %s25 = scalar_select %p22, %s24, %s15
    %p26 = scmp.ge.s32.totalorder %s25, 1
    %s27 = scalar_select %p26, 0, %s25
    %s28 = ssub.s32 %s15, %s27
    %s29 = ssub.s32 %s16, %s23
    %s30 = sor.u32 %s28, %s29
    %p31 = scmp.eq.s32.totalorder %s30, 0
    %s33 = sadd.s32 %s32, 1
    %s34 = scalar_select %p31, %s32, %s33
    %p37 = pneg %p31
    %p38 = scmp.eq.s32.totalorder %s8, 1
    %p39 = por %p37, %p38
    %p40 = scmp.ne.s32.totalorder %s32, %s35
    %p41 = scmp.eq.s32.totalorder %s8, 0
    %p42 = por %p40, %p41
    %p43 = scmp.ne.s32.totalorder %s32, %s35
    %p44 = scmp.eq.s32.totalorder %s13, 1
    %p45 = por %p43, %p44
    %p46 = scmp.ne.s32.totalorder %s35, %s36
    %p47 = scmp.eq.s32.totalorder %s13, 0
    %p48 = por %p46, %p47
    %p49 = scmp.ne.s32.totalorder %s35, %s36
    %p50 = scmp.eq.s32.totalorder %s14, 1
    %p51 = por %p49, %p50
    %p53 = scmp.ne.s32.totalorder %s36, %s52
    %p54 = scmp.eq.s32.totalorder %s14, 0
    %p55 = por %p53, %p54
    %s57 = sadd.s32 %s56, 1
    %p60 = scmp.eq.s32.totalorder %s8, 1
    %p61 = scmp.ne.s32.totalorder %s56, %s58
    %p62 = scmp.eq.s32.totalorder %s8, 0
    %p63 = por %p61, %p62
    %p64 = scmp.ne.s32.totalorder %s56, %s58
    %p65 = scmp.eq.s32.totalorder %s13, 1
    %p66 = por %p64, %p65
    %p67 = scmp.ne.s32.totalorder %s58, %s59
    %p68 = scmp.eq.s32.totalorder %s13, 0
    %p69 = por %p67, %p68
    %p70 = scmp.ne.s32.totalorder %s58, %s59
    %p71 = scmp.eq.s32.totalorder %s14, 1
    %p72 = por %p70, %p71
    %p74 = scmp.ne.s32.totalorder %s59, %s73
    %p75 = scmp.eq.s32.totalorder %s14, 0
    %p76 = por %p74, %p75
    %s77 = ssub.s32 %s15, %s27
    %s78 = ssub.s32 %s16, %s23
    %s79 = sor.u32 %s77, %s78
    %p80 = scmp.eq.s32.totalorder %s79, 0
    %s82 = sadd.s32 %s81, 1
    %s83 = scalar_select %p80, %s81, %s82
    %p86 = pneg %p80
    %p87 = scmp.eq.s32.totalorder %s8, 1
    %p88 = por %p86, %p87
    %p89 = scmp.ne.s32.totalorder %s81, %s84
    %p90 = scmp.eq.s32.totalorder %s8, 0
    %p91 = por %p89, %p90
    %p92 = scmp.ne.s32.totalorder %s81, %s84
    %p93 = scmp.eq.s32.totalorder %s13, 1
    %p94 = por %p92, %p93
    %p95 = scmp.ne.s32.totalorder %s84, %s85
    %p96 = scmp.eq.s32.totalorder %s13, 0
    %p97 = por %p95, %p96
    %p98 = scmp.ne.s32.totalorder %s84, %s85
    %p99 = scmp.eq.s32.totalorder %s14, 1
    %p100 = por %p98, %p99
    %p102 = scmp.ne.s32.totalorder %s85, %s101
    %p103 = scmp.eq.s32.totalorder %s14, 0
    %p104 = por %p102, %p103
    %p105 = scmp.le.s32.totalorder 1, %s8
    %p106 = scmp.lt.s32.totalorder %s8, 3
    %p107 = pnand %p105, %p106
    %p108 = pneg %p107
    // Predicated region
    $region9: #{normalize_nchw.1} parent=5 // pred_check
      _
    $region10: #{normalize_nchw.1} parent=5 // pred_check_branch
      %110 = sbr.rel (%p107) target = $region12
    $region11: #{normalize_nchw.1} parent=5 // pred_region
      %s111 = ssub.s32 %s8, 1
      // Predicated region
      $region13: #{normalize_nchw.1} parent=11 // pred_check
        %p112 = pneg %p69
      $region14: #{normalize_nchw.1} parent=11 // pred_check_branch
        %114 = sbr.rel (%p112) target = $region16
      $region15: #{normalize_nchw.1} parent=11 // pred_region
        _
      $region16: #{normalize_nchw.1} parent=11 // pred_fallthru
        _
    $region12: #{normalize_nchw.1} parent=5 // pred_fallthru
      _
    %p115 = scmp.lt.s32.totalorder %s8, 2
    // Predicated region
    $region17: #{normalize_nchw.1} parent=5 // pred_check
      %p116 = pneg %p115
    $region18: #{normalize_nchw.1} parent=5 // pred_check_branch
      %118 = sbr.rel (%p116) target = $region20
    $region19: #{normalize_nchw.1} parent=5 // pred_region
      // Predicated region
      $region21: #{normalize_nchw.1} parent=19 // pred_check
        %p119 = pneg %p42
      $region22: #{normalize_nchw.1} parent=19 // pred_check_branch
        %121 = sbr.rel (%p119) target = $region24
      $region23: #{normalize_nchw.1} parent=19 // pred_region
        %p122 = scmp.lt.s32.totalorder %s15, 0
        %s123 = scalar_select %p122, %s15, 0
        %p124 = scmp.lt.s32.totalorder %s16, 1
        %s125 = scalar_select %p124, %s16, 1
        %s126 = smul.addr %s123, 2
        %s127 = sadd.s32 %s125, %s126
        %s128 = smul.addr %s127, 8
        %s129 = scalar_lea.vmem %s0, %s128
      $region24: #{normalize_nchw.1} parent=19 // pred_fallthru
        _
    $region20: #{normalize_nchw.1} parent=5 // pred_fallthru
      _
    %p130 = scmp.le.s32.totalorder 1, %s8
    %p131 = scmp.lt.s32.totalorder %s8, 3
    %p132 = pnand %p130, %p131
    %p133 = pneg %p132
    // Predicated region
    $region25: #{normalize_nchw.1} parent=5 // pred_check
      _
    $region26: #{normalize_nchw.1} parent=5 // pred_check_branch
      %135 = sbr.rel (%p132) target = $region28
    $region27: #{normalize_nchw.1} parent=5 // pred_region
      %s136 = ssub.s32 %s8, 1
      %p137 = scmp.lt.s32.totalorder %s17, 0
      %s138 = scalar_select %p137, %s17, 0
      %p139 = scmp.lt.s32.totalorder %s18, 1
      %s140 = scalar_select %p139, %s18, 1
      %s141 = smul.addr %s138, 2
      %s142 = sadd.s32 %s140, %s141
      %s143 = smul.addr %s142, 8
      %s144 = scalar_lea.vmem %s0, %s143
      %p145 = pneg %p48
      %p146 = pneg %p45
      %p147 = pneg %p69
      %p148 = pneg %p66
      %p149 = pneg %p97
      %p150 = pneg %p94
      %p151 = scmp.lt.s32.totalorder %s17, 0
      %s152 = scalar_select %p151, %s17, 0
      %p153 = scmp.lt.s32.totalorder %s18, 1
      %s154 = scalar_select %p153, %s18, 1
      %s155 = smul.addr %s152, 2
      %s156 = sadd.s32 %s154, %s155
      %s157 = smul.addr %s156, 8
      %s158 = scalar_lea.vmem %s2, %s157
      %p159 = scmp.lt.s32.totalorder %s17, 0
      %s160 = scalar_select %p159, %s17, 0
      %p161 = scmp.lt.s32.totalorder %s18, 1
      %s162 = scalar_select %p161, %s18, 1
      %s163 = smul.addr %s160, 2
      %s164 = sadd.s32 %s162, %s163
      %s165 = smul.addr %s164, 8
      %s166 = scalar_lea.vmem %s0, %s165
      %p167 = scmp.lt.s32.totalorder %s17, 0
      %s168 = scalar_select %p167, %s17, 0
      %p169 = scmp.lt.s32.totalorder %s18, 1
      %s170 = scalar_select %p169, %s18, 1
      %s171 = smul.addr %s168, 2
      %s172 = sadd.s32 %s170, %s171
      %s173 = smul.addr %s172, 8
      %s174 = scalar_lea.vmem %s2, %s173
      %s175 = smul.u32 %s17, 8
      %s176 = scalar_lea.vmem %s1, %s175
      %v177 = vld [vmem:[%s176] sm:$0xff]
      %v178 = vld [vmem:[%s166] sm:$0xff]
      %180 = vset.pattern.permute.xlu0 0
      %181 = vperm.xlu0 %180, %v177
      %v182 = vpop.permute.xlu0 %181
      %v184 = vsub.f32 %v178, %v182
      %185 = vset.pattern.permute.xlu0 1
      %186 = vperm.xlu0 %185, %v177
      %v187 = vpop.permute.xlu0 %186
      %v189 = vmul.f32 %v184, %v187
      %190 = vst [vmem:[%s174] sm:$0xff] %v189
      %p191 = scmp.lt.s32.totalorder %s17, 0
      %s192 = scalar_select %p191, %s17, 0
      %p193 = scmp.lt.s32.totalorder %s18, 1
      %s194 = scalar_select %p193, %s18, 1
      %s195 = smul.addr %s192, 2
      %s196 = sadd.s32 %s194, %s195
      %s197 = smul.addr %s196, 8
      %s198 = scalar_lea.vmem %s2, %s197
      // Predicated region
      $region29: #{normalize_nchw.1} parent=27 // pred_check
        %p199 = pneg %p94
      $region30: #{normalize_nchw.1} parent=27 // pred_check_branch
        %201 = sbr.rel (%p199) target = $region32
      $region31: #{normalize_nchw.1} parent=27 // pred_region
        _
      $region32: #{normalize_nchw.1} parent=27 // pred_fallthru
        _
    $region28: #{normalize_nchw.1} parent=5 // pred_fallthru
      _
    %p202 = scmp.le.s32.totalorder 2, %s8
    // Predicated region
    $region33: #{normalize_nchw.1} parent=5 // pred_check
      %p203 = pneg %p202
    $region34: #{normalize_nchw.1} parent=5 // pred_check_branch
      %205 = sbr.rel (%p203) target = $region36
    $region35: #{normalize_nchw.1} parent=5 // pred_region
      %s206 = ssub.s32 %s8, 2
      // Predicated region
      $region37: #{normalize_nchw.1} parent=35 // pred_check
        %p207 = pneg %p100
      $region38: #{normalize_nchw.1} parent=35 // pred_check_branch
        %209 = sbr.rel (%p207) target = $region40
      $region39: #{normalize_nchw.1} parent=35 // pred_region
        %p210 = scmp.lt.s32.totalorder %s19, 0
        %s211 = scalar_select %p210, %s19, 0
        %p212 = scmp.lt.s32.totalorder %s20, 1
        %s213 = scalar_select %p212, %s20, 1
        %s214 = smul.addr %s211, 2
        %s215 = sadd.s32 %s213, %s214
        %s216 = smul.addr %s215, 8
        %s217 = scalar_lea.vmem %s2, %s216
      $region40: #{normalize_nchw.1} parent=35 // pred_fallthru
        _
    $region36: #{normalize_nchw.1} parent=5 // pred_fallthru
      _
  $region6: #{normalize_nchw.1} parent=0 // loop_footer
    %s12 = sadd.s32 1, %s8
  $region7: #{normalize_nchw.1} parent=0 // loop_footer_branch
    %7 = sbr.rel target = $region3
  $region8: #{normalize_nchw.1} parent=0 // loop_exit
    _

</llo_original>
